<compile_context>
chip_gen: v7x
topology: tpu7x:2x2x1
jax: 0.10.0
libtpu: 0.0.40
codegen_flags: <defaults>
</compile_context>

<pallas_src>
import jax
import jax.numpy as jnp
from jax.experimental import pallas as pl
from jax.experimental.pallas import tpu as pltpu


def _round_up(x, m):
    return (x + m - 1) // m * m


def _io_norm_f_ct_kernel(zT_ref, w1T_ref, b1T_ref, w2T_ref, b2T_ref, outT_ref):
    # h^T = tanh(W1'^T @ z^T + b1'^T)            (hidden, tile_b)
    h = jnp.tanh(
        jnp.dot(w1T_ref[...], zT_ref[...], preferred_element_type=jnp.float32)
        + b1T_ref[...]
    )
    # out^T = W2'^T @ h^T + b2'^T                (nx, tile_b); 1/tau pre-folded
    outT_ref[...] = (
        jnp.dot(w2T_ref[...], h, preferred_element_type=jnp.float32)
        + b2T_ref[...]
    )


def io_normalization_f_ct(x, u, umean, ustd, tau, w1x, w1u, b1, w2, b2,
                          *, max_tile_b=1024):
    """forward(x, u) = fun(x, (u - umean)/ustd) / tau, fun = 2-layer tanh MLP."""
    B, nx = x.shape
    _, nu = u.shape
    hidden = w1x.shape[1]

    x = x.astype(jnp.float32)
    u = u.astype(jnp.float32)

    # ---- constant folding of module constants (free at runtime) -------------
    inv_std = 1.0 / jnp.asarray(ustd, jnp.float32).reshape(1, nu)
    umean_r = jnp.asarray(umean, jnp.float32).reshape(1, nu)
    inv_tau = 1.0 / jnp.asarray(tau, jnp.float32).reshape(())

    w1u_f = w1u * inv_std.T                        # absorbs  / ustd
    b1_f = b1 - (umean_r * inv_std) @ w1u          # absorbs  - umean
    w1 = jnp.concatenate([w1x, w1u_f], axis=0)     # (nx+nu, hidden) stacked K
    w2_f = w2 * inv_tau                            # absorbs  / tau
    b2_f = b2 * inv_tau

    # ---- transposed (lane-dense) operands: features on sublanes, batch lanes
    w1T = jnp.transpose(w1)                        # (hidden, nx+nu)
    w2T = jnp.transpose(w2_f)                      # (nx, hidden)
    b1T = jnp.transpose(b1_f)                      # (hidden, 1)
    b2T = jnp.transpose(b2_f)                      # (nx, 1)
    zT = jnp.transpose(jnp.concatenate([x, u], axis=1))   # (nx+nu, B)

    # ---- batch tiling: pad lane axis to 128, pick tile dividing the padded B
    b_pad = _round_up(B, 128)
    n128 = b_pad // 128
    max_units = max(1, min(n128, max_tile_b // 128))
    tile_units = max(d for d in range(1, max_units + 1) if n128 % d == 0)
    tile_b = 128 * tile_units
    grid = (b_pad // tile_b,)

    if b_pad != B:
        zT = jnp.pad(zT, ((0, 0), (0, b_pad - B)))

    outT = pl.pallas_call(
        _io_norm_f_ct_kernel,
        out_shape=jax.ShapeDtypeStruct((nx, b_pad), jnp.float32),
        grid=grid,
        in_specs=[
            pl.BlockSpec((nx + nu, tile_b), lambda i: (0, i)),   # z^T (batch-tiled)
            pl.BlockSpec((hidden, nx + nu), lambda i: (0, 0)),   # W1'^T (replicated)
            pl.BlockSpec((hidden, 1), lambda i: (0, 0)),         # b1'^T
            pl.BlockSpec((nx, hidden), lambda i: (0, 0)),        # W2'^T
            pl.BlockSpec((nx, 1), lambda i: (0, 0)),             # b2'^T
        ],
        out_specs=pl.BlockSpec((nx, tile_b), lambda i: (0, i)),
        compiler_params=pltpu.CompilerParams(
            dimension_semantics=("parallel",),    # shard batch tiles over TCs (v7x)
        ),
    )(zT, w1T, b1T, w2T, b2T)

    return jnp.transpose(outT[:, :B])              # back to (B, nx)


def io_normalization_f_ct_stages(xs, us, umean, ustd, tau, w1x, w1u, b1, w2, b2):
    """Evaluate f_CT at S stacked RK stages / time steps in ONE pallas_call.

    xs: (S, B, nx), us: (S, B, nu) -> (S, B, nx).  f is row-wise, so stages
    stack along the batch axis; this amortizes dispatch overhead (dominant at
    small B) across all evaluations while weights stay resident per call.
    """
    S, B, nx = xs.shape
    nu = us.shape[-1]
    out = io_normalization_f_ct(
        xs.reshape(S * B, nx), us.reshape(S * B, nu),
        umean, ustd, tau, w1x, w1u, b1, w2, b2)
    return out.reshape(S, B, nx)


if __name__ == "__main__":
    key = jax.random.PRNGKey(0)
    B, nx, nu, hidden = 8, 16, 4, 32

    ks = jax.random.split(key, 8)
    x = jax.random.normal(ks[0], (B, nx), dtype=jnp.float32)
    u = jax.random.normal(ks[1], (B, nu), dtype=jnp.float32)

    # normalization constants (as the module's __init__ would hold)
    umean = jax.random.normal(ks[2], (1, nu), dtype=jnp.float32) * 0.1
    ustd = jnp.abs(jax.random.normal(ks[3], (1, nu), dtype=jnp.float32)) + 0.5
    tau = 2.0

    # deterministic params for `fun` (2-layer tanh MLP, concat(x,u) -> nx)
    w1x = jax.random.normal(ks[4], (nx, hidden), dtype=jnp.float32) / jnp.sqrt(nx + nu)
    w1u = jax.random.normal(ks[5], (nu, hidden), dtype=jnp.float32) / jnp.sqrt(nx + nu)
    b1 = jax.random.normal(ks[6], (1, hidden), dtype=jnp.float32) * 0.1
    w2 = jax.random.normal(ks[7], (hidden, nx), dtype=jnp.float32) / jnp.sqrt(hidden)
    b2 = jnp.zeros((1, nx), dtype=jnp.float32)

    out = io_normalization_f_ct(x, u, umean, ustd, tau, w1x, w1u, b1, w2, b2)
    jax.block_until_ready(out)

    # plain-JAX reference of the (un-folded) module semantics
    u_n = (u - umean) / ustd
    ref = (jnp.tanh(x @ w1x + u_n @ w1u + b1) @ w2 + b2) / tau
    assert jnp.allclose(out, ref, atol=1e-5, rtol=1e-5), "mismatch vs reference"

    # fused multi-stage path (RK stages evaluated in a single launch)
    S = 4
    xs = jnp.stack([x + 0.1 * s for s in range(S)])
    us = jnp.stack([u - 0.05 * s for s in range(S)])
    outs = io_normalization_f_ct_stages(xs, us, umean, ustd, tau,
                                        w1x, w1u, b1, w2, b2)
    jax.block_until_ready(outs)
    refs = jnp.stack([
        (jnp.tanh(xs[s] @ w1x + ((us[s] - umean) / ustd) @ w1u + b1) @ w2 + b2) / tau
        for s in range(S)])
    assert jnp.allclose(outs, refs, atol=1e-5, rtol=1e-5), "stage mismatch"

    print("KERNEL_OK")
</pallas_src>

<mosaic_0001>
module attributes {stable_mosaic.version = 11 : i64} {
  func.func @_io_norm_f_ct_kernel(%arg0: i32, %arg1: memref<20x128xf32, #tpu.memory_space<vmem>>, %arg2: memref<32x20xf32, #tpu.memory_space<vmem>>, %arg3: memref<32x1xf32, #tpu.memory_space<vmem>>, %arg4: memref<16x32xf32, #tpu.memory_space<vmem>>, %arg5: memref<16x1xf32, #tpu.memory_space<vmem>>, %arg6: memref<16x128xf32, #tpu.memory_space<vmem>>) attributes {dimension_semantics = [#tpu.dimension_semantics<parallel>], iteration_bounds = array<i64: 1>, scalar_prefetch = 0 : i64, scratch_operands = 0 : i64, tpu.core_type = #tpu.core_type<tc>, window_params = [{transform_indices = @transform_0, window_bounds = array<i64: 20, 128>}, {pipeline_mode = #tpu.pipeline_mode<synchronous>, transform_indices = @transform_1, window_bounds = array<i64: 32, 20>}, {pipeline_mode = #tpu.pipeline_mode<synchronous>, transform_indices = @transform_2, window_bounds = array<i64: 32, 1>}, {pipeline_mode = #tpu.pipeline_mode<synchronous>, transform_indices = @transform_3, window_bounds = array<i64: 16, 32>}, {pipeline_mode = #tpu.pipeline_mode<synchronous>, transform_indices = @transform_4, window_bounds = array<i64: 16, 1>}, {transform_indices = @transform_5, window_bounds = array<i64: 16, 128>}]} {
    %c0 = arith.constant 0 : index
    %c0_0 = arith.constant 0 : index
    %0 = vector.load %arg2[%c0, %c0_0] : memref<32x20xf32, #tpu.memory_space<vmem>>, vector<32x20xf32>
    %c0_1 = arith.constant 0 : index
    %c0_2 = arith.constant 0 : index
    %1 = vector.load %arg1[%c0_1, %c0_2] : memref<20x128xf32, #tpu.memory_space<vmem>>, vector<20x128xf32>
    %cst = arith.constant dense<0.000000e+00> : vector<32x128xf32>
    %2 = tpu.matmul %0, %1, %cst {dimension_numbers = #tpu.dot_dimension_numbers<[1], [0], [0], [1], [0, 0, 1, 1], [], []>} : vector<32x20xf32>, vector<20x128xf32>, vector<32x128xf32> -> vector<32x128xf32>
    %c0_3 = arith.constant 0 : index
    %c0_4 = arith.constant 0 : index
    %3 = vector.load %arg3[%c0_3, %c0_4] : memref<32x1xf32, #tpu.memory_space<vmem>>, vector<32x1xf32>
    %4 = vector.broadcast %3 : vector<32x1xf32> to vector<32x128xf32>
    %5 = arith.addf %2, %4 : vector<32x128xf32>
    %6 = math.tanh %5 : vector<32x128xf32>
    %c0_5 = arith.constant 0 : index
    %c0_6 = arith.constant 0 : index
    %7 = vector.load %arg4[%c0_5, %c0_6] : memref<16x32xf32, #tpu.memory_space<vmem>>, vector<16x32xf32>
    %cst_7 = arith.constant dense<0.000000e+00> : vector<16x128xf32>
    %8 = tpu.matmul %7, %6, %cst_7 {dimension_numbers = #tpu.dot_dimension_numbers<[1], [0], [0], [1], [0, 0, 1, 1], [], []>} : vector<16x32xf32>, vector<32x128xf32>, vector<16x128xf32> -> vector<16x128xf32>
    %c0_8 = arith.constant 0 : index
    %c0_9 = arith.constant 0 : index
    %9 = vector.load %arg5[%c0_8, %c0_9] : memref<16x1xf32, #tpu.memory_space<vmem>>, vector<16x1xf32>
    %10 = vector.broadcast %9 : vector<16x1xf32> to vector<16x128xf32>
    %11 = arith.addf %8, %10 : vector<16x128xf32>
    %c0_10 = arith.constant 0 : index
    %c0_11 = arith.constant 0 : index
    %12 = vector.load %arg6[%c0_10, %c0_11] : memref<16x128xf32, #tpu.memory_space<vmem>>, vector<16x128xf32>
    tpu.vector_store %arg6[%c0_10, %c0_11], %11 {strides = array<i32>} : memref<16x128xf32, #tpu.memory_space<vmem>>, vector<16x128xf32>,
    return
  }
  func.func @transform_0(%arg0: i32) -> (i32, i32) {
    %c0_i32 = arith.constant 0 : i32
    %c0_i32_0 = arith.constant 0 : i32
    return %c0_i32, %arg0 : i32, i32
  }
  func.func @transform_1(%arg0: i32) -> (i32, i32) {
    %c0_i32 = arith.constant 0 : i32
    %c0_i32_0 = arith.constant 0 : i32
    %c0_i32_1 = arith.constant 0 : i32
    return %c0_i32, %c0_i32_0 : i32, i32
  }
  func.func @transform_2(%arg0: i32) -> (i32, i32) {
    %c0_i32 = arith.constant 0 : i32
    %c0_i32_0 = arith.constant 0 : i32
    %c0_i32_1 = arith.constant 0 : i32
    return %c0_i32, %c0_i32_0 : i32, i32
  }
  func.func @transform_3(%arg0: i32) -> (i32, i32) {
    %c0_i32 = arith.constant 0 : i32
    %c0_i32_0 = arith.constant 0 : i32
    %c0_i32_1 = arith.constant 0 : i32
    return %c0_i32, %c0_i32_0 : i32, i32
  }
  func.func @transform_4(%arg0: i32) -> (i32, i32) {
    %c0_i32 = arith.constant 0 : i32
    %c0_i32_0 = arith.constant 0 : i32
    %c0_i32_1 = arith.constant 0 : i32
    return %c0_i32, %c0_i32_0 : i32, i32
  }
  func.func @transform_5(%arg0: i32) -> (i32, i32) {
    %c0_i32 = arith.constant 0 : i32
    %c0_i32_0 = arith.constant 0 : i32
    return %c0_i32, %arg0 : i32, i32
  }
}

</mosaic_0001>

<llo_original>
// kernel: tpu_custom_call.1
$region0: #{tpu_custom_call.1}
  #allocation0 [shape = 'u32[]', space=smem, size = 0x4, offset = 0x4, fixed_abs, tag = 'smem constant byte address 0x4 - core index']
  #allocation1 [shape = 'u32[144,128]{1,0:T(1,128)}', space=vmem, size = 0x12000, scoped, tag = 'internal scratch']
  %s0 = inlined_call_operand.vmem [shape: f32[20,128], index: 0, kind: input, shape index: {}]
  %s1 = inlined_call_operand.vmem [shape: f32[32,20], index: 1, kind: input, shape index: {}]
  %s2 = inlined_call_operand.vmem [shape: f32[32,1], index: 2, kind: input, shape index: {}]
  %s3 = inlined_call_operand.vmem [shape: f32[16,32], index: 3, kind: input, shape index: {}]
  %s4 = inlined_call_operand.vmem [shape: f32[16,1], index: 4, kind: input, shape index: {}]
  %s5 = inlined_call_operand.hbm [shape: f32[16,128], index: 5, kind: output, shape index: {}]
  %s6 = sld [smem:[#allocation0]]
  $region30: #{tpu_custom_call.1} parent=0
    _
  %s8 = ssub.s32 1, %s6
  %s9 = scalar_select 0, %s8, %s6
  $region1: #{tpu_custom_call.1} parent=0
    #allocation2 [shape = 'u8[8192]{0}', space=vmem, size = 0x2000, scoped, tag = 'output window, operand 0, single buffered']
    #allocation3 [shape = 's32[1]{0}', space=sflag, size = 0x4, scoped, tag = 'scoped memory for tpu_custom_call.1']
    %10 = vsyncpa [#allocation3], 0
    // Predicated region
    $region2: #{tpu_custom_call.1} parent=1 // pred_check
      _
    $region3: #{tpu_custom_call.1} parent=1 // pred_check_branch
      %12 = sbr.rel (0) target = $region5
    $region4: #{tpu_custom_call.1} parent=1 // pred_region
      _
    $region5: #{tpu_custom_call.1} parent=1 // pred_fallthru
      _
    // Predicated region
    $region6: #{tpu_custom_call.1} parent=1 // pred_check
      _
    $region7: #{tpu_custom_call.1} parent=1 // pred_check_branch
      %14 = sbr.rel (0) target = $region9
    $region8: #{tpu_custom_call.1} parent=1 // pred_region
      _
    $region9: #{tpu_custom_call.1} parent=1 // pred_fallthru
      _
    // Predicated region
    $region10: #{tpu_custom_call.1} parent=1 // pred_check
      _
    $region11: #{tpu_custom_call.1} parent=1 // pred_check_branch
      %16 = sbr.rel (0) target = $region13
    $region12: #{tpu_custom_call.1} parent=1 // pred_region
      _
    $region13: #{tpu_custom_call.1} parent=1 // pred_fallthru
      _
    // Predicated region
    $region14: #{tpu_custom_call.1} parent=1 // pred_check
      _
    $region15: #{tpu_custom_call.1} parent=1 // pred_check_branch
      %18 = sbr.rel (0) target = $region17
    $region16: #{tpu_custom_call.1} parent=1 // pred_region
      _
    $region17: #{tpu_custom_call.1} parent=1 // pred_fallthru
      _
    // Predicated region
    $region18: #{tpu_custom_call.1} parent=1 // pred_check
      _
    $region19: #{tpu_custom_call.1} parent=1 // pred_check_branch
      %20 = sbr.rel (0) target = $region21
    $region20: #{tpu_custom_call.1} parent=1 // pred_region
      _
    $region21: #{tpu_custom_call.1} parent=1 // pred_fallthru
      _
    %v21 = vld [vmem:[%s1] sm:$0xff]
    %v22 = vld [vmem:[%s1 + $0x8] sm:$0xff]
    %v23 = vld [vmem:[%s1 + $0x10] sm:$0xff]
    %v24 = vld [vmem:[%s1 + $0x18] sm:$0xff]
    %v25 = vld [vmem:[%s0] sm:$0xff]
    %v26 = vld [vmem:[%s0 + $0x8] sm:$0xff]
    %v27 = vld [vmem:[%s0 + $0x10] sm:$0xf]
    %v28 = vld [vmem:[%s2] sm:$0xff]
    %v29 = vld [vmem:[%s2 + $0x8] sm:$0xff]
    %v30 = vld [vmem:[%s2 + $0x10] sm:$0xff]
    %v31 = vld [vmem:[%s2 + $0x18] sm:$0xff]
    %33 = vset.pattern.permute.xlu0 0
    %34 = vperm.xlu0 %33, %v28
    %v35 = vpop.permute.xlu0 %34
    %38 = vset.pattern.permute.xlu0 0
    %39 = vperm.xlu0 %38, %v29
    %v40 = vpop.permute.xlu0 %39
    %43 = vset.pattern.permute.xlu0 0
    %44 = vperm.xlu0 %43, %v30
    %v45 = vpop.permute.xlu0 %44
    %48 = vset.pattern.permute.xlu0 0
    %49 = vperm.xlu0 %48, %v31
    %v50 = vpop.permute.xlu0 %49
    %vm52 = vcmask 162816
    %v54 = vsel %vm52, %v21, 0
    %v57 = vsel %vm52, %v22, 0
    %v60 = vsel %vm52, %v23, 0
    %v63 = vsel %vm52, %v24, 0
    %vm65 = vcmask 1043456
    %v67 = vsel %vm65, %v27, 0
    %69 = vmatprep.subr.mxu0 0.0
    %70 = vmatpush1.msra.mxu0 %v25
    %71 = vmatprep.subr.mxu0 0.0
    %72 = vmatpush1.msra.mxu0 %v26
    %73 = vmatprep.subr.mxu0 0.0
    %74 = vmatpush1.msra.mxu0 %v67
    %75 = vmatprep.subr.mxu0 0.0
    %76 = vmatpush1.msra.mxu0 0.0
    %77 = vmatprep.subr.mxu0 0.0
    %78 = vmatpush1.msra.mxu0 0.0
    %79 = vmatprep.subr.mxu0 0.0
    %80 = vmatpush1.msra.mxu0 0.0
    %81 = vmatprep.subr.mxu0 0.0
    %82 = vmatpush1.msra.mxu0 0.0
    %83 = vmatprep.subr.mxu0 0.0
    %84 = vmatpush1.msra.mxu0 0.0
    %85 = vmatprep.subr.mxu0 0.0
    %86 = vmatpush1.msra.mxu0 0.0
    %87 = vmatprep.subr.mxu0 0.0
    %88 = vmatpush1.msra.mxu0 0.0
    %89 = vmatprep.subr.mxu0 0.0
    %90 = vmatpush1.msra.mxu0 0.0
    %91 = vmatprep.subr.mxu0 0.0
    %92 = vmatpush1.msra.mxu0 0.0
    %93 = vmatprep.subr.mxu0 0.0
    %94 = vmatpush1.msra.mxu0 0.0
    %95 = vmatprep.subr.mxu0 0.0
    %96 = vmatpush1.msra.mxu0 0.0
    %97 = vmatprep.subr.mxu0 0.0
    %98 = vmatpush1.msra.mxu0 0.0
    %99 = vmatprep.subr.mxu0 0.0
    %100 = vmatpush1.msra.mxu0 0.0
    %101 = vmatprep.subr.mxu0 0.0
    %102 = vmatpush1.msra.mxu0 0.0
    %103 = vmatprep.subr.mxu0 0.0
    %104 = vmatpush1.msra.mxu0 0.0
    %105 = vmatprep.subr.mxu0 0.0
    %106 = vmatpush1.msra.mxu0 0.0
    %107 = vmatprep.subr.mxu0 0.0
    %108 = vmatpush1.msra.mxu0 0.0
    %109 = vmatprep.subr.mxu0 0.0
    %110 = vmatpush1.msra.mxu0 0.0
    %111 = vmatprep.subr.mxu0 0.0
    %112 = vmatpush1.msra.mxu0 0.0
    %113 = vmatprep.subr.mxu0 0.0
    %114 = vmatpush1.msra.mxu0 0.0
    %115 = vmatprep.subr.mxu0 0.0
    %116 = vmatpush1.msra.mxu0 0.0
    %117 = vmatprep.subr.mxu0 0.0
    %118 = vmatpush1.msra.mxu0 0.0
    %119 = vmatprep.subr.mxu0 0.0
    %120 = vmatpush1.msra.mxu0 0.0
    %121 = vmatprep.subr.mxu0 0.0
    %122 = vmatpush1.msra.mxu0 0.0
    %123 = vmatprep.subr.mxu0 0.0
    %124 = vmatpush1.msra.mxu0 0.0
    %125 = vmatprep.subr.mxu0 0.0
    %126 = vmatpush1.msra.mxu0 0.0
    %127 = vmatprep.subr.mxu0 0.0
    %128 = vmatpush1.msra.mxu0 0.0
    %129 = vmatprep.subr.mxu0 0.0
    %130 = vmatpush1.msra.mxu0 0.0
    %131 = vmatprep.subr.mxu0 0.0
    %132 = vmatpush1.msra.mxu0 0.0
    %133 = vmatprep.mubr.f32.mxu0 0.0
    %134 = vmatmul.mubr.f32.gmra.mrb[0].mxu0 %v54
    %v135 = vpop.f32.mrb[0].mxu0
    %v136 = vadd.f32 %v35, %v135
    %v137 = vpop.f32.mrb[0].mxu0
    %138 = vmatprep.mubr.f32.mxu0 0.0
    %139 = vmatmul.mubr.f32.gmra.mrb[0].mxu0 %v57
    %v140 = vpop.f32.mrb[0].mxu0
    %v141 = vadd.f32 %v40, %v140
    %v142 = vpop.f32.mrb[0].mxu0
    %143 = vmatprep.mubr.f32.mxu0 0.0
    %144 = vmatmul.mubr.f32.gmra.mrb[0].mxu0 %v60
    %v145 = vpop.f32.mrb[0].mxu0
    %v146 = vadd.f32 %v45, %v145
    %v147 = vpop.f32.mrb[0].mxu0
    %148 = vmatprep.mubr.f32.mxu0 0.0
    %149 = vmatmul.mubr.f32.gmra.mrb[0].mxu0 %v63
    %v150 = vpop.f32.mrb[0].mxu0
    %v151 = vadd.f32 %v50, %v150
    %v152 = vpop.f32.mrb[0].mxu0
    %153 = vdwg.mxu0
    %v154 = vtanh.pop %v136
    %v155 = vtanh.pop %v141
    %v156 = vtanh.pop %v146
    %v157 = vtanh.pop %v151
    %v158 = vld [vmem:[%s3] sm:$0xff]
    %v159 = vld [vmem:[%s3 + $0x8] sm:$0xff]
    %v160 = vld [vmem:[%s4] sm:$0xff]
    %v161 = vld [vmem:[%s4 + $0x8] sm:$0xff]
    %163 = vset.pattern.permute.xlu0 0
    %164 = vperm.xlu0 %163, %v160
    %v165 = vpop.permute.xlu0 %164
    %168 = vset.pattern.permute.xlu0 0
    %169 = vperm.xlu0 %168, %v161
    %v170 = vpop.permute.xlu0 %169
    %vm172 = vcmask 261120
    %v174 = vsel %vm172, %v158, 0
    %v177 = vsel %vm172, %v159, 0
    %179 = vmatprep.subr.mxu0 0.0
    %180 = vmatpush1.msra.mxu0 %v154
    %181 = vmatprep.subr.mxu0 0.0
    %182 = vmatpush1.msra.mxu0 %v155
    %183 = vmatprep.subr.mxu0 0.0
    %184 = vmatpush1.msra.mxu0 %v156
    %185 = vmatprep.subr.mxu0 0.0
    %186 = vmatpush1.msra.mxu0 %v157
    %187 = vmatprep.subr.mxu0 0.0
    %188 = vmatpush1.msra.mxu0 0.0
    %189 = vmatprep.subr.mxu0 0.0
    %190 = vmatpush1.msra.mxu0 0.0
    %191 = vmatprep.subr.mxu0 0.0
    %192 = vmatpush1.msra.mxu0 0.0
    %193 = vmatprep.subr.mxu0 0.0
    %194 = vmatpush1.msra.mxu0 0.0
    %195 = vmatprep.subr.mxu0 0.0
    %196 = vmatpush1.msra.mxu0 0.0
    %197 = vmatprep.subr.mxu0 0.0
    %198 = vmatpush1.msra.mxu0 0.0
    %199 = vmatprep.subr.mxu0 0.0
    %200 = vmatpush1.msra.mxu0 0.0
    %201 = vmatprep.subr.mxu0 0.0
    %202 = vmatpush1.msra.mxu0 0.0
    %203 = vmatprep.subr.mxu0 0.0
    %204 = vmatpush1.msra.mxu0 0.0
    %205 = vmatprep.subr.mxu0 0.0
    %206 = vmatpush1.msra.mxu0 0.0
    %207 = vmatprep.subr.mxu0 0.0
    %208 = vmatpush1.msra.mxu0 0.0
    %209 = vmatprep.subr.mxu0 0.0
    %210 = vmatpush1.msra.mxu0 0.0
    %211 = vmatprep.subr.mxu0 0.0
    %212 = vmatpush1.msra.mxu0 0.0
    %213 = vmatprep.subr.mxu0 0.0
    %214 = vmatpush1.msra.mxu0 0.0
    %215 = vmatprep.subr.mxu0 0.0
    %216 = vmatpush1.msra.mxu0 0.0
    %217 = vmatprep.subr.mxu0 0.0
    %218 = vmatpush1.msra.mxu0 0.0
    %219 = vmatprep.subr.mxu0 0.0
    %220 = vmatpush1.msra.mxu0 0.0
    %221 = vmatprep.subr.mxu0 0.0
    %222 = vmatpush1.msra.mxu0 0.0
    %223 = vmatprep.subr.mxu0 0.0
    %224 = vmatpush1.msra.mxu0 0.0
    %225 = vmatprep.subr.mxu0 0.0
    %226 = vmatpush1.msra.mxu0 0.0
    %227 = vmatprep.subr.mxu0 0.0
    %228 = vmatpush1.msra.mxu0 0.0
    %229 = vmatprep.subr.mxu0 0.0
    %230 = vmatpush1.msra.mxu0 0.0
    %231 = vmatprep.subr.mxu0 0.0
    %232 = vmatpush1.msra.mxu0 0.0
    %233 = vmatprep.subr.mxu0 0.0
    %234 = vmatpush1.msra.mxu0 0.0
    %235 = vmatprep.subr.mxu0 0.0
    %236 = vmatpush1.msra.mxu0 0.0
    %237 = vmatprep.subr.mxu0 0.0
    %238 = vmatpush1.msra.mxu0 0.0
    %239 = vmatprep.subr.mxu0 0.0
    %240 = vmatpush1.msra.mxu0 0.0
    %241 = vmatprep.subr.mxu0 0.0
    %242 = vmatpush1.msra.mxu0 0.0
    %243 = vmatprep.mubr.f32.mxu0 0.0
    %244 = vmatmul.mubr.f32.gmra.mrb[0].mxu0 %v174
    %v245 = vpop.f32.mrb[0].mxu0
    %v246 = vadd.f32 %v165, %v245
    %v247 = vpop.f32.mrb[0].mxu0
    %248 = vmatprep.mubr.f32.mxu0 0.0
    %249 = vmatmul.mubr.f32.gmra.mrb[0].mxu0 %v177
    %v250 = vpop.f32.mrb[0].mxu0
    %v251 = vadd.f32 %v170, %v250
    %v252 = vpop.f32.mrb[0].mxu0
    %253 = vdwg.mxu0
    %254 = vst [vmem:[#allocation2] sm:$0xff] %v246
    %255 = vst [vmem:[#allocation2 + $0x8] sm:$0xff] %v251
    // Predicated region
    $region22: #{tpu_custom_call.1} parent=1 // pred_check
      _
    $region23: #{tpu_custom_call.1} parent=1 // pred_check_branch
      %257 = sbr.rel (0) target = $region25
    $region24: #{tpu_custom_call.1} parent=1 // pred_region
      %s259 = ssub.s32 256, 256
      %260 = vsyncadd [#allocation3], %s259
      %s261 = sshll.u32 [#allocation2], 4
      %s262 = int_to_ptr.vmem [resolvable:$true] %s261
      %267 = dma.vmem_to_hbm [thread:$0]  %s262, 256, %s5, [#allocation3], 128, 128, 8
    $region25: #{tpu_custom_call.1} parent=1 // pred_fallthru
      _
    // Predicated region
    $region26: #{tpu_custom_call.1} parent=1 // pred_check
      _
    $region27: #{tpu_custom_call.1} parent=1 // pred_check_branch
      %269 = sbr.rel (0) target = $region29
    $region28: #{tpu_custom_call.1} parent=1 // pred_region
      %270 = dma.done [#allocation3], 256
    $region29: #{tpu_custom_call.1} parent=1 // pred_fallthru
      _
    %271 = vsyncpa [#allocation3], 1

</llo_original>
